<compile_context>
chip_gen: v7x
topology: tpu7x:2x2x1
jax: 0.10.0
libtpu: 0.0.40
codegen_flags: <defaults>
</compile_context>

<pallas_src>
import jax
import jax.numpy as jnp
from jax.experimental import pallas as pl
from jax.experimental.pallas import tpu as pltpu


def clip_embedding_kernel(tok_ref, table_hbm, pos_ref, out_ref, buf, sems):
    # tok_ref:   (B, n_token)        int32, SMEM (scalar prefetch)
    # table_hbm: (n_vocab, n_embd)   f32, HBM (pl.ANY, manually DMA'd)
    # pos_ref:   (n_token, n_embd)   f32, VMEM
    # out_ref:   (1, n_token, n_embd) f32, VMEM (one batch row per grid step)
    # buf:       (n_token, n_embd)   f32 VMEM scratch (gather destination)
    # sems:      (n_token,)          DMA semaphores
    b = pl.program_id(0)
    n_token = pos_ref.shape[0]

    # Issue all row-gather DMAs; they are independent and run concurrently.
    copies = []
    for t in range(n_token):
        row = tok_ref[b, t]
        cp = pltpu.make_async_copy(
            table_hbm.at[pl.ds(row, 1), :],
            buf.at[pl.ds(t, 1), :],
            sems.at[t],
        )
        cp.start()
        copies.append(cp)
    for cp in copies:
        cp.wait()

    # Positional broadcast-add (VPU) and one lane-dense store.
    out_ref[0] = buf[...] + pos_ref[...]


def clip_embedding(tokens, token_embedding, position_embedding):
    B, n_token = tokens.shape
    n_vocab, n_embd = token_embedding.shape
    assert position_embedding.shape == (n_token, n_embd)
    dtype = token_embedding.dtype

    row_bytes = n_embd * jnp.dtype(dtype).itemsize
    cost = pl.CostEstimate(
        flops=B * n_token * n_embd,                      # the positional add
        transcendentals=0,
        bytes_accessed=(B * n_token * 4                  # token ids
                        + B * n_token * row_bytes        # gathered table rows
                        + n_token * row_bytes            # positional embedding
                        + B * n_token * row_bytes),      # output
    )

    grid_spec = pltpu.PrefetchScalarGridSpec(
        num_scalar_prefetch=1,          # tokens -> SMEM, visible to index_maps
        grid=(B,),
        in_specs=[
            pl.BlockSpec(memory_space=pl.ANY),                       # table, HBM
            pl.BlockSpec((n_token, n_embd), lambda b, tok: (0, 0)),  # pos emb
        ],
        out_specs=pl.BlockSpec((1, n_token, n_embd), lambda b, tok: (b, 0, 0)),
        scratch_shapes=[
            pltpu.VMEM((n_token, n_embd), dtype),
            pltpu.SemaphoreType.DMA((n_token,)),
        ],
    )

    return pl.pallas_call(
        clip_embedding_kernel,
        out_shape=jax.ShapeDtypeStruct((B, n_token, n_embd), dtype),
        grid_spec=grid_spec,
        compiler_params=pltpu.CompilerParams(
            dimension_semantics=("parallel",)),
        cost_estimate=cost,
    )(tokens.astype(jnp.int32), token_embedding, position_embedding)


if __name__ == "__main__":
    # Small, deterministic synthetic configuration.
    # n_embd=128 keeps the output lane-dense (unmasked vector stores).
    n_vocab, n_embd, n_token, batch = 512, 128, 8, 2

    key = jax.random.PRNGKey(0)
    k_tok, k_table, k_pos = jax.random.split(key, 3)

    tokens = jax.random.randint(k_tok, (batch, n_token), 0, n_vocab,
                                dtype=jnp.int32)
    # nn.Embedding default init ~ N(0, 1); scaled here for numerical tidiness.
    token_embedding = (jax.random.normal(k_table, (n_vocab, n_embd),
                                         dtype=jnp.float32) * 0.02)
    # PyTorch inits position_embedding to zeros; use small nonzero values so
    # the broadcast-add path is actually exercised (synthetic init).
    position_embedding = (jax.random.normal(k_pos, (n_token, n_embd),
                                            dtype=jnp.float32) * 0.01)

    out = jax.block_until_ready(
        clip_embedding(tokens, token_embedding, position_embedding))

    # Pure-JAX reference of the PyTorch forward.
    ref = token_embedding[tokens] + position_embedding[None, :, :]

    assert out.shape == (batch, n_token, n_embd)
    assert out.dtype == jnp.float32
    assert jnp.allclose(out, ref, atol=1e-6, rtol=1e-6)

    print("KERNEL_OK")
</pallas_src>

<mosaic_0001>
module attributes {stable_mosaic.version = 11 : i64} {
  func.func @clip_embedding_kernel(%arg0: i32, %arg1: memref<2x8xi32, #tpu.memory_space<smem>>, %arg2: memref<512x128xf32, #tpu.memory_space<any>>, %arg3: memref<8x128xf32, #tpu.memory_space<vmem>>, %arg4: memref<1x8x128xf32, #tpu.memory_space<vmem>>, %arg5: memref<8x128xf32, #tpu.memory_space<vmem>>, %arg6: memref<8x!tpu.dma_semaphore, #tpu.memory_space<semaphore_mem>>) attributes {dimension_semantics = [#tpu.dimension_semantics<parallel>], iteration_bounds = array<i64: 2>, scalar_prefetch = 1 : i64, scratch_operands = 2 : i64, tpu.core_type = #tpu.core_type<tc>, window_params = [{}, {pipeline_mode = #tpu.pipeline_mode<synchronous>, transform_indices = @transform_1, window_bounds = array<i64: 8, 128>}, {transform_indices = @transform_2, window_bounds = array<i64: 1, 8, 128>}]} {
    %0 = arith.index_cast %arg0 : i32 to index
    %c0 = arith.constant 0 : index
    %1 = memref.load %arg1[%0, %c0] : memref<2x8xi32, #tpu.memory_space<smem>>
    %c0_i32 = arith.constant 0 : i32
    %c0_i32_0 = arith.constant 0 : i32
    %2 = tpu.memref_slice %arg2[%1, %c0_i32_0] : memref<512x128xf32, #tpu.memory_space<any>> -> memref<1x128xf32, #tpu.memory_space<any>>
    %c0_i32_1 = arith.constant 0 : i32
    %c0_i32_2 = arith.constant 0 : i32
    %3 = tpu.memref_slice %arg5[%c0_i32_1, %c0_i32_2] : memref<8x128xf32, #tpu.memory_space<vmem>> -> memref<1x128xf32, #tpu.memory_space<vmem>>
    %4 = tpu.memref_slice %arg6[%c0_i32] : memref<8x!tpu.dma_semaphore, #tpu.memory_space<semaphore_mem>> -> memref<1x!tpu.dma_semaphore, #tpu.memory_space<semaphore_mem>>
    %5 = tpu.memref_squeeze %4 : memref<1x!tpu.dma_semaphore, #tpu.memory_space<semaphore_mem>> -> memref<!tpu.dma_semaphore, #tpu.memory_space<semaphore_mem>>
    tpu.enqueue_dma source(%2 : memref<1x128xf32, #tpu.memory_space<any>>) target(%3 : memref<1x128xf32, #tpu.memory_space<vmem>>) target_semaphore(%5 : memref<!tpu.dma_semaphore, #tpu.memory_space<semaphore_mem>>)
    %6 = arith.index_cast %arg0 : i32 to index
    %c1 = arith.constant 1 : index
    %7 = memref.load %arg1[%6, %c1] : memref<2x8xi32, #tpu.memory_space<smem>>
    %c1_i32 = arith.constant 1 : i32
    %c0_i32_3 = arith.constant 0 : i32
    %8 = tpu.memref_slice %arg2[%7, %c0_i32_3] : memref<512x128xf32, #tpu.memory_space<any>> -> memref<1x128xf32, #tpu.memory_space<any>>
    %c1_i32_4 = arith.constant 1 : i32
    %c0_i32_5 = arith.constant 0 : i32
    %9 = tpu.memref_slice %arg5[%c1_i32_4, %c0_i32_5] : memref<8x128xf32, #tpu.memory_space<vmem>> -> memref<1x128xf32, #tpu.memory_space<vmem>>
    %10 = tpu.memref_slice %arg6[%c1_i32] : memref<8x!tpu.dma_semaphore, #tpu.memory_space<semaphore_mem>> -> memref<1x!tpu.dma_semaphore, #tpu.memory_space<semaphore_mem>>
    %11 = tpu.memref_squeeze %10 : memref<1x!tpu.dma_semaphore, #tpu.memory_space<semaphore_mem>> -> memref<!tpu.dma_semaphore, #tpu.memory_space<semaphore_mem>>
    tpu.enqueue_dma source(%8 : memref<1x128xf32, #tpu.memory_space<any>>) target(%9 : memref<1x128xf32, #tpu.memory_space<vmem>>) target_semaphore(%11 : memref<!tpu.dma_semaphore, #tpu.memory_space<semaphore_mem>>)
    %12 = arith.index_cast %arg0 : i32 to index
    %c2 = arith.constant 2 : index
    %13 = memref.load %arg1[%12, %c2] : memref<2x8xi32, #tpu.memory_space<smem>>
    %c2_i32 = arith.constant 2 : i32
    %c0_i32_6 = arith.constant 0 : i32
    %14 = tpu.memref_slice %arg2[%13, %c0_i32_6] : memref<512x128xf32, #tpu.memory_space<any>> -> memref<1x128xf32, #tpu.memory_space<any>>
    %c2_i32_7 = arith.constant 2 : i32
    %c0_i32_8 = arith.constant 0 : i32
    %15 = tpu.memref_slice %arg5[%c2_i32_7, %c0_i32_8] : memref<8x128xf32, #tpu.memory_space<vmem>> -> memref<1x128xf32, #tpu.memory_space<vmem>>
    %16 = tpu.memref_slice %arg6[%c2_i32] : memref<8x!tpu.dma_semaphore, #tpu.memory_space<semaphore_mem>> -> memref<1x!tpu.dma_semaphore, #tpu.memory_space<semaphore_mem>>
    %17 = tpu.memref_squeeze %16 : memref<1x!tpu.dma_semaphore, #tpu.memory_space<semaphore_mem>> -> memref<!tpu.dma_semaphore, #tpu.memory_space<semaphore_mem>>
    tpu.enqueue_dma source(%14 : memref<1x128xf32, #tpu.memory_space<any>>) target(%15 : memref<1x128xf32, #tpu.memory_space<vmem>>) target_semaphore(%17 : memref<!tpu.dma_semaphore, #tpu.memory_space<semaphore_mem>>)
    %18 = arith.index_cast %arg0 : i32 to index
    %c3 = arith.constant 3 : index
    %19 = memref.load %arg1[%18, %c3] : memref<2x8xi32, #tpu.memory_space<smem>>
    %c3_i32 = arith.constant 3 : i32
    %c0_i32_9 = arith.constant 0 : i32
    %20 = tpu.memref_slice %arg2[%19, %c0_i32_9] : memref<512x128xf32, #tpu.memory_space<any>> -> memref<1x128xf32, #tpu.memory_space<any>>
    %c3_i32_10 = arith.constant 3 : i32
    %c0_i32_11 = arith.constant 0 : i32
    %21 = tpu.memref_slice %arg5[%c3_i32_10, %c0_i32_11] : memref<8x128xf32, #tpu.memory_space<vmem>> -> memref<1x128xf32, #tpu.memory_space<vmem>>
    %22 = tpu.memref_slice %arg6[%c3_i32] : memref<8x!tpu.dma_semaphore, #tpu.memory_space<semaphore_mem>> -> memref<1x!tpu.dma_semaphore, #tpu.memory_space<semaphore_mem>>
    %23 = tpu.memref_squeeze %22 : memref<1x!tpu.dma_semaphore, #tpu.memory_space<semaphore_mem>> -> memref<!tpu.dma_semaphore, #tpu.memory_space<semaphore_mem>>
    tpu.enqueue_dma source(%20 : memref<1x128xf32, #tpu.memory_space<any>>) target(%21 : memref<1x128xf32, #tpu.memory_space<vmem>>) target_semaphore(%23 : memref<!tpu.dma_semaphore, #tpu.memory_space<semaphore_mem>>)
    %24 = arith.index_cast %arg0 : i32 to index
    %c4 = arith.constant 4 : index
    %25 = memref.load %arg1[%24, %c4] : memref<2x8xi32, #tpu.memory_space<smem>>
    %c4_i32 = arith.constant 4 : i32
    %c0_i32_12 = arith.constant 0 : i32
    %26 = tpu.memref_slice %arg2[%25, %c0_i32_12] : memref<512x128xf32, #tpu.memory_space<any>> -> memref<1x128xf32, #tpu.memory_space<any>>
    %c4_i32_13 = arith.constant 4 : i32
    %c0_i32_14 = arith.constant 0 : i32
    %27 = tpu.memref_slice %arg5[%c4_i32_13, %c0_i32_14] : memref<8x128xf32, #tpu.memory_space<vmem>> -> memref<1x128xf32, #tpu.memory_space<vmem>>
    %28 = tpu.memref_slice %arg6[%c4_i32] : memref<8x!tpu.dma_semaphore, #tpu.memory_space<semaphore_mem>> -> memref<1x!tpu.dma_semaphore, #tpu.memory_space<semaphore_mem>>
    %29 = tpu.memref_squeeze %28 : memref<1x!tpu.dma_semaphore, #tpu.memory_space<semaphore_mem>> -> memref<!tpu.dma_semaphore, #tpu.memory_space<semaphore_mem>>
    tpu.enqueue_dma source(%26 : memref<1x128xf32, #tpu.memory_space<any>>) target(%27 : memref<1x128xf32, #tpu.memory_space<vmem>>) target_semaphore(%29 : memref<!tpu.dma_semaphore, #tpu.memory_space<semaphore_mem>>)
    %30 = arith.index_cast %arg0 : i32 to index
    %c5 = arith.constant 5 : index
    %31 = memref.load %arg1[%30, %c5] : memref<2x8xi32, #tpu.memory_space<smem>>
    %c5_i32 = arith.constant 5 : i32
    %c0_i32_15 = arith.constant 0 : i32
    %32 = tpu.memref_slice %arg2[%31, %c0_i32_15] : memref<512x128xf32, #tpu.memory_space<any>> -> memref<1x128xf32, #tpu.memory_space<any>>
    %c5_i32_16 = arith.constant 5 : i32
    %c0_i32_17 = arith.constant 0 : i32
    %33 = tpu.memref_slice %arg5[%c5_i32_16, %c0_i32_17] : memref<8x128xf32, #tpu.memory_space<vmem>> -> memref<1x128xf32, #tpu.memory_space<vmem>>
    %34 = tpu.memref_slice %arg6[%c5_i32] : memref<8x!tpu.dma_semaphore, #tpu.memory_space<semaphore_mem>> -> memref<1x!tpu.dma_semaphore, #tpu.memory_space<semaphore_mem>>
    %35 = tpu.memref_squeeze %34 : memref<1x!tpu.dma_semaphore, #tpu.memory_space<semaphore_mem>> -> memref<!tpu.dma_semaphore, #tpu.memory_space<semaphore_mem>>
    tpu.enqueue_dma source(%32 : memref<1x128xf32, #tpu.memory_space<any>>) target(%33 : memref<1x128xf32, #tpu.memory_space<vmem>>) target_semaphore(%35 : memref<!tpu.dma_semaphore, #tpu.memory_space<semaphore_mem>>)
    %36 = arith.index_cast %arg0 : i32 to index
    %c6 = arith.constant 6 : index
    %37 = memref.load %arg1[%36, %c6] : memref<2x8xi32, #tpu.memory_space<smem>>
    %c6_i32 = arith.constant 6 : i32
    %c0_i32_18 = arith.constant 0 : i32
    %38 = tpu.memref_slice %arg2[%37, %c0_i32_18] : memref<512x128xf32, #tpu.memory_space<any>> -> memref<1x128xf32, #tpu.memory_space<any>>
    %c6_i32_19 = arith.constant 6 : i32
    %c0_i32_20 = arith.constant 0 : i32
    %39 = tpu.memref_slice %arg5[%c6_i32_19, %c0_i32_20] : memref<8x128xf32, #tpu.memory_space<vmem>> -> memref<1x128xf32, #tpu.memory_space<vmem>>
    %40 = tpu.memref_slice %arg6[%c6_i32] : memref<8x!tpu.dma_semaphore, #tpu.memory_space<semaphore_mem>> -> memref<1x!tpu.dma_semaphore, #tpu.memory_space<semaphore_mem>>
    %41 = tpu.memref_squeeze %40 : memref<1x!tpu.dma_semaphore, #tpu.memory_space<semaphore_mem>> -> memref<!tpu.dma_semaphore, #tpu.memory_space<semaphore_mem>>
    tpu.enqueue_dma source(%38 : memref<1x128xf32, #tpu.memory_space<any>>) target(%39 : memref<1x128xf32, #tpu.memory_space<vmem>>) target_semaphore(%41 : memref<!tpu.dma_semaphore, #tpu.memory_space<semaphore_mem>>)
    %42 = arith.index_cast %arg0 : i32 to index
    %c7 = arith.constant 7 : index
    %43 = memref.load %arg1[%42, %c7] : memref<2x8xi32, #tpu.memory_space<smem>>
    %c7_i32 = arith.constant 7 : i32
    %c0_i32_21 = arith.constant 0 : i32
    %44 = tpu.memref_slice %arg2[%43, %c0_i32_21] : memref<512x128xf32, #tpu.memory_space<any>> -> memref<1x128xf32, #tpu.memory_space<any>>
    %c7_i32_22 = arith.constant 7 : i32
    %c0_i32_23 = arith.constant 0 : i32
    %45 = tpu.memref_slice %arg5[%c7_i32_22, %c0_i32_23] : memref<8x128xf32, #tpu.memory_space<vmem>> -> memref<1x128xf32, #tpu.memory_space<vmem>>
    %46 = tpu.memref_slice %arg6[%c7_i32] : memref<8x!tpu.dma_semaphore, #tpu.memory_space<semaphore_mem>> -> memref<1x!tpu.dma_semaphore, #tpu.memory_space<semaphore_mem>>
    %47 = tpu.memref_squeeze %46 : memref<1x!tpu.dma_semaphore, #tpu.memory_space<semaphore_mem>> -> memref<!tpu.dma_semaphore, #tpu.memory_space<semaphore_mem>>
    tpu.enqueue_dma source(%44 : memref<1x128xf32, #tpu.memory_space<any>>) target(%45 : memref<1x128xf32, #tpu.memory_space<vmem>>) target_semaphore(%47 : memref<!tpu.dma_semaphore, #tpu.memory_space<semaphore_mem>>)
    %c0_i32_24 = arith.constant 0 : i32
    %c0_i32_25 = arith.constant 0 : i32
    %48 = tpu.memref_slice %arg2[%1, %c0_i32_25] : memref<512x128xf32, #tpu.memory_space<any>> -> memref<1x128xf32, #tpu.memory_space<any>>
    %c0_i32_26 = arith.constant 0 : i32
    %c0_i32_27 = arith.constant 0 : i32
    %49 = tpu.memref_slice %arg5[%c0_i32_26, %c0_i32_27] : memref<8x128xf32, #tpu.memory_space<vmem>> -> memref<1x128xf32, #tpu.memory_space<vmem>>
    %50 = tpu.memref_slice %arg6[%c0_i32_24] : memref<8x!tpu.dma_semaphore, #tpu.memory_space<semaphore_mem>> -> memref<1x!tpu.dma_semaphore, #tpu.memory_space<semaphore_mem>>
    %51 = tpu.memref_squeeze %50 : memref<1x!tpu.dma_semaphore, #tpu.memory_space<semaphore_mem>> -> memref<!tpu.dma_semaphore, #tpu.memory_space<semaphore_mem>>
    tpu.wait_dma2 semaphore(%51 : memref<!tpu.dma_semaphore, #tpu.memory_space<semaphore_mem>>) src(%48 : memref<1x128xf32, #tpu.memory_space<any>>) dst(%49 : memref<1x128xf32, #tpu.memory_space<vmem>>)
    %c1_i32_28 = arith.constant 1 : i32
    %c0_i32_29 = arith.constant 0 : i32
    %52 = tpu.memref_slice %arg2[%7, %c0_i32_29] : memref<512x128xf32, #tpu.memory_space<any>> -> memref<1x128xf32, #tpu.memory_space<any>>
    %c1_i32_30 = arith.constant 1 : i32
    %c0_i32_31 = arith.constant 0 : i32
    %53 = tpu.memref_slice %arg5[%c1_i32_30, %c0_i32_31] : memref<8x128xf32, #tpu.memory_space<vmem>> -> memref<1x128xf32, #tpu.memory_space<vmem>>
    %54 = tpu.memref_slice %arg6[%c1_i32_28] : memref<8x!tpu.dma_semaphore, #tpu.memory_space<semaphore_mem>> -> memref<1x!tpu.dma_semaphore, #tpu.memory_space<semaphore_mem>>
    %55 = tpu.memref_squeeze %54 : memref<1x!tpu.dma_semaphore, #tpu.memory_space<semaphore_mem>> -> memref<!tpu.dma_semaphore, #tpu.memory_space<semaphore_mem>>
    tpu.wait_dma2 semaphore(%55 : memref<!tpu.dma_semaphore, #tpu.memory_space<semaphore_mem>>) src(%52 : memref<1x128xf32, #tpu.memory_space<any>>) dst(%53 : memref<1x128xf32, #tpu.memory_space<vmem>>)
    %c2_i32_32 = arith.constant 2 : i32
    %c0_i32_33 = arith.constant 0 : i32
    %56 = tpu.memref_slice %arg2[%13, %c0_i32_33] : memref<512x128xf32, #tpu.memory_space<any>> -> memref<1x128xf32, #tpu.memory_space<any>>
    %c2_i32_34 = arith.constant 2 : i32
    %c0_i32_35 = arith.constant 0 : i32
    %57 = tpu.memref_slice %arg5[%c2_i32_34, %c0_i32_35] : memref<8x128xf32, #tpu.memory_space<vmem>> -> memref<1x128xf32, #tpu.memory_space<vmem>>
    %58 = tpu.memref_slice %arg6[%c2_i32_32] : memref<8x!tpu.dma_semaphore, #tpu.memory_space<semaphore_mem>> -> memref<1x!tpu.dma_semaphore, #tpu.memory_space<semaphore_mem>>
    %59 = tpu.memref_squeeze %58 : memref<1x!tpu.dma_semaphore, #tpu.memory_space<semaphore_mem>> -> memref<!tpu.dma_semaphore, #tpu.memory_space<semaphore_mem>>
    tpu.wait_dma2 semaphore(%59 : memref<!tpu.dma_semaphore, #tpu.memory_space<semaphore_mem>>) src(%56 : memref<1x128xf32, #tpu.memory_space<any>>) dst(%57 : memref<1x128xf32, #tpu.memory_space<vmem>>)
    %c3_i32_36 = arith.constant 3 : i32
    %c0_i32_37 = arith.constant 0 : i32
    %60 = tpu.memref_slice %arg2[%19, %c0_i32_37] : memref<512x128xf32, #tpu.memory_space<any>> -> memref<1x128xf32, #tpu.memory_space<any>>
    %c3_i32_38 = arith.constant 3 : i32
    %c0_i32_39 = arith.constant 0 : i32
    %61 = tpu.memref_slice %arg5[%c3_i32_38, %c0_i32_39] : memref<8x128xf32, #tpu.memory_space<vmem>> -> memref<1x128xf32, #tpu.memory_space<vmem>>
    %62 = tpu.memref_slice %arg6[%c3_i32_36] : memref<8x!tpu.dma_semaphore, #tpu.memory_space<semaphore_mem>> -> memref<1x!tpu.dma_semaphore, #tpu.memory_space<semaphore_mem>>
    %63 = tpu.memref_squeeze %62 : memref<1x!tpu.dma_semaphore, #tpu.memory_space<semaphore_mem>> -> memref<!tpu.dma_semaphore, #tpu.memory_space<semaphore_mem>>
    tpu.wait_dma2 semaphore(%63 : memref<!tpu.dma_semaphore, #tpu.memory_space<semaphore_mem>>) src(%60 : memref<1x128xf32, #tpu.memory_space<any>>) dst(%61 : memref<1x128xf32, #tpu.memory_space<vmem>>)
    %c4_i32_40 = arith.constant 4 : i32
    %c0_i32_41 = arith.constant 0 : i32
    %64 = tpu.memref_slice %arg2[%25, %c0_i32_41] : memref<512x128xf32, #tpu.memory_space<any>> -> memref<1x128xf32, #tpu.memory_space<any>>
    %c4_i32_42 = arith.constant 4 : i32
    %c0_i32_43 = arith.constant 0 : i32
    %65 = tpu.memref_slice %arg5[%c4_i32_42, %c0_i32_43] : memref<8x128xf32, #tpu.memory_space<vmem>> -> memref<1x128xf32, #tpu.memory_space<vmem>>
    %66 = tpu.memref_slice %arg6[%c4_i32_40] : memref<8x!tpu.dma_semaphore, #tpu.memory_space<semaphore_mem>> -> memref<1x!tpu.dma_semaphore, #tpu.memory_space<semaphore_mem>>
    %67 = tpu.memref_squeeze %66 : memref<1x!tpu.dma_semaphore, #tpu.memory_space<semaphore_mem>> -> memref<!tpu.dma_semaphore, #tpu.memory_space<semaphore_mem>>
    tpu.wait_dma2 semaphore(%67 : memref<!tpu.dma_semaphore, #tpu.memory_space<semaphore_mem>>) src(%64 : memref<1x128xf32, #tpu.memory_space<any>>) dst(%65 : memref<1x128xf32, #tpu.memory_space<vmem>>)
    %c5_i32_44 = arith.constant 5 : i32
    %c0_i32_45 = arith.constant 0 : i32
    %68 = tpu.memref_slice %arg2[%31, %c0_i32_45] : memref<512x128xf32, #tpu.memory_space<any>> -> memref<1x128xf32, #tpu.memory_space<any>>
    %c5_i32_46 = arith.constant 5 : i32
    %c0_i32_47 = arith.constant 0 : i32
    %69 = tpu.memref_slice %arg5[%c5_i32_46, %c0_i32_47] : memref<8x128xf32, #tpu.memory_space<vmem>> -> memref<1x128xf32, #tpu.memory_space<vmem>>
    %70 = tpu.memref_slice %arg6[%c5_i32_44] : memref<8x!tpu.dma_semaphore, #tpu.memory_space<semaphore_mem>> -> memref<1x!tpu.dma_semaphore, #tpu.memory_space<semaphore_mem>>
    %71 = tpu.memref_squeeze %70 : memref<1x!tpu.dma_semaphore, #tpu.memory_space<semaphore_mem>> -> memref<!tpu.dma_semaphore, #tpu.memory_space<semaphore_mem>>
    tpu.wait_dma2 semaphore(%71 : memref<!tpu.dma_semaphore, #tpu.memory_space<semaphore_mem>>) src(%68 : memref<1x128xf32, #tpu.memory_space<any>>) dst(%69 : memref<1x128xf32, #tpu.memory_space<vmem>>)
    %c6_i32_48 = arith.constant 6 : i32
    %c0_i32_49 = arith.constant 0 : i32
    %72 = tpu.memref_slice %arg2[%37, %c0_i32_49] : memref<512x128xf32, #tpu.memory_space<any>> -> memref<1x128xf32, #tpu.memory_space<any>>
    %c6_i32_50 = arith.constant 6 : i32
    %c0_i32_51 = arith.constant 0 : i32
    %73 = tpu.memref_slice %arg5[%c6_i32_50, %c0_i32_51] : memref<8x128xf32, #tpu.memory_space<vmem>> -> memref<1x128xf32, #tpu.memory_space<vmem>>
    %74 = tpu.memref_slice %arg6[%c6_i32_48] : memref<8x!tpu.dma_semaphore, #tpu.memory_space<semaphore_mem>> -> memref<1x!tpu.dma_semaphore, #tpu.memory_space<semaphore_mem>>
    %75 = tpu.memref_squeeze %74 : memref<1x!tpu.dma_semaphore, #tpu.memory_space<semaphore_mem>> -> memref<!tpu.dma_semaphore, #tpu.memory_space<semaphore_mem>>
    tpu.wait_dma2 semaphore(%75 : memref<!tpu.dma_semaphore, #tpu.memory_space<semaphore_mem>>) src(%72 : memref<1x128xf32, #tpu.memory_space<any>>) dst(%73 : memref<1x128xf32, #tpu.memory_space<vmem>>)
    %c7_i32_52 = arith.constant 7 : i32
    %c0_i32_53 = arith.constant 0 : i32
    %76 = tpu.memref_slice %arg2[%43, %c0_i32_53] : memref<512x128xf32, #tpu.memory_space<any>> -> memref<1x128xf32, #tpu.memory_space<any>>
    %c7_i32_54 = arith.constant 7 : i32
    %c0_i32_55 = arith.constant 0 : i32
    %77 = tpu.memref_slice %arg5[%c7_i32_54, %c0_i32_55] : memref<8x128xf32, #tpu.memory_space<vmem>> -> memref<1x128xf32, #tpu.memory_space<vmem>>
    %78 = tpu.memref_slice %arg6[%c7_i32_52] : memref<8x!tpu.dma_semaphore, #tpu.memory_space<semaphore_mem>> -> memref<1x!tpu.dma_semaphore, #tpu.memory_space<semaphore_mem>>
    %79 = tpu.memref_squeeze %78 : memref<1x!tpu.dma_semaphore, #tpu.memory_space<semaphore_mem>> -> memref<!tpu.dma_semaphore, #tpu.memory_space<semaphore_mem>>
    tpu.wait_dma2 semaphore(%79 : memref<!tpu.dma_semaphore, #tpu.memory_space<semaphore_mem>>) src(%76 : memref<1x128xf32, #tpu.memory_space<any>>) dst(%77 : memref<1x128xf32, #tpu.memory_space<vmem>>)
    %c0_56 = arith.constant 0 : index
    %c0_57 = arith.constant 0 : index
    %80 = vector.load %arg5[%c0_56, %c0_57] : memref<8x128xf32, #tpu.memory_space<vmem>>, vector<8x128xf32>
    %c0_58 = arith.constant 0 : index
    %c0_59 = arith.constant 0 : index
    %81 = vector.load %arg3[%c0_58, %c0_59] : memref<8x128xf32, #tpu.memory_space<vmem>>, vector<8x128xf32>
    %82 = arith.addf %80, %81 : vector<8x128xf32>
    %c0_60 = arith.constant 0 : index
    %c0_61 = arith.constant 0 : index
    %c0_62 = arith.constant 0 : index
    %83 = vector.load %arg4[%c0_60, %c0_61, %c0_62] : memref<1x8x128xf32, #tpu.memory_space<vmem>>, vector<1x8x128xf32>
    %84 = vector.shape_cast %83 : vector<1x8x128xf32> to vector<8x128xf32>
    %85 = vector.shape_cast %82 : vector<8x128xf32> to vector<1x8x128xf32>
    tpu.vector_store %arg4[%c0_60, %c0_61, %c0_62], %85 {strides = array<i32>} : memref<1x8x128xf32, #tpu.memory_space<vmem>>, vector<1x8x128xf32>,
    return
  }
  func.func @transform_1(%arg0: i32, %arg1: memref<2x8xi32, #tpu.memory_space<smem>>) -> (i32, i32) {
    %c0_i32 = arith.constant 0 : i32
    %c0_i32_0 = arith.constant 0 : i32
    %c0_i32_1 = arith.constant 0 : i32
    return %c0_i32, %c0_i32_0 : i32, i32
  }
  func.func @transform_2(%arg0: i32, %arg1: memref<2x8xi32, #tpu.memory_space<smem>>) -> (i32, i32, i32) {
    %c0_i32 = arith.constant 0 : i32
    %c0_i32_0 = arith.constant 0 : i32
    %c0_i32_1 = arith.constant 0 : i32
    return %arg0, %c0_i32, %c0_i32_0 : i32, i32, i32
  }
}

</mosaic_0001>

<llo_original>
// kernel: tpu_custom_call.1
$region0: #{tpu_custom_call.1}
  #allocation0 [shape = 'u32[]', space=smem, size = 0x4, offset = 0x4, fixed_abs, tag = 'smem constant byte address 0x4 - core index']
  #allocation1 [shape = 'u32[144,128]{1,0:T(1,128)}', space=vmem, size = 0x12000, scoped, tag = 'internal scratch']
  #allocation2 [shape = 'f32[8,128]{1,0:T(8,128)}', space=vmem, size = 0x1000, scoped, tag = 'scratch operand']
  #allocation3 [shape = 's32[8]{0}', space=sflag, size = 0x20, scoped, tag = 'scratch operand']
  #allocation4 [shape = 's32[1]{0}', space=sflag, size = 0x4, scoped, tag = 'scoped memory for tpu_custom_call.1']
  #allocation5 [shape = 'u8[1024]{0}', space=smem, size = 0x400, scoped, tag = 'prefetched SMEM operand 0']
  #allocation10 [shape = 's32[]', space=sflag, size = 0x4, offset = 0, fixed_abs, tag = 'sflag constant byte address 0x0 - dummy sync flag']
  #allocation11 [shape = 's32[]', space=sflag, size = 0x4, offset = 0, fixed_abs, tag = 'sflag constant byte address 0x0 - dummy sync flag']
  #allocation12 [shape = 'u32[]', space=smem, size = 0x4, offset = 0x44, fixed_abs, tag = 'smem constant byte address 0x44 - assertion arg 0']
  #allocation13 [shape = 'u32[]', space=smem, size = 0x4, offset = 0x48, fixed_abs, tag = 'smem constant byte address 0x48 - assertion arg 1']
  #allocation14 [shape = 's32[]', space=sflag, size = 0x4, offset = 0, fixed_abs, tag = 'sflag constant byte address 0x0 - dummy sync flag']
  #allocation15 [shape = 's32[]', space=sflag, size = 0x4, offset = 0, fixed_abs, tag = 'sflag constant byte address 0x0 - dummy sync flag']
  #allocation16 [shape = 's32[]', space=sflag, size = 0x4, offset = 0, fixed_abs, tag = 'sflag constant byte address 0x0 - dummy sync flag']
  #allocation17 [shape = 's32[]', space=sflag, size = 0x4, offset = 0, fixed_abs, tag = 'sflag constant byte address 0x0 - dummy sync flag']
  #allocation18 [shape = 's32[]', space=sflag, size = 0x4, offset = 0, fixed_abs, tag = 'sflag constant byte address 0x0 - dummy sync flag']
  #allocation19 [shape = 's32[]', space=sflag, size = 0x4, offset = 0, fixed_abs, tag = 'sflag constant byte address 0x0 - dummy sync flag']
  #allocation20 [shape = 's32[]', space=sflag, size = 0x4, offset = 0, fixed_abs, tag = 'sflag constant byte address 0x0 - dummy sync flag']
  #allocation21 [shape = 's32[]', space=sflag, size = 0x4, offset = 0, fixed_abs, tag = 'sflag constant byte address 0x0 - dummy sync flag']
  #allocation22 [shape = 's32[]', space=sflag, size = 0x4, offset = 0, fixed_abs, tag = 'sflag constant byte address 0x0 - dummy sync flag']
  #allocation23 [shape = 's32[]', space=sflag, size = 0x4, offset = 0, fixed_abs, tag = 'sflag constant byte address 0x0 - dummy sync flag']
  #allocation24 [shape = 's32[]', space=sflag, size = 0x4, offset = 0, fixed_abs, tag = 'sflag constant byte address 0x0 - dummy sync flag']
  #allocation25 [shape = 's32[]', space=sflag, size = 0x4, offset = 0, fixed_abs, tag = 'sflag constant byte address 0x0 - dummy sync flag']
  #allocation26 [shape = 's32[]', space=sflag, size = 0x4, offset = 0, fixed_abs, tag = 'sflag constant byte address 0x0 - dummy sync flag']
  #allocation27 [shape = 's32[]', space=sflag, size = 0x4, offset = 0, fixed_abs, tag = 'sflag constant byte address 0x0 - dummy sync flag']
  %s0 = inlined_call_operand.hbm [shape: s32[2,8], index: 0, kind: input, shape index: {}]
  %s1 = inlined_call_operand.hbm [shape: f32[512,128], index: 1, kind: input, shape index: {}]
  %s2 = inlined_call_operand.hbm [shape: f32[8,128], index: 2, kind: input, shape index: {}]
  %s3 = inlined_call_operand.hbm [shape: f32[2,8,128], index: 3, kind: output, shape index: {}]
  %s4 = sld [smem:[#allocation0]]
  $region73: #{tpu_custom_call.1} parent=0
    _
  %s6 = ssub.s32 1, %s4
  %s7 = scalar_select 0, %s6, %s4
  %9 = dma.hbm_to_smem %s0, 32, [#allocation5], [#allocation4]
  %10 = dma.done [#allocation4], 32
  %11 = sfence
  $region1: #{tpu_custom_call.1} parent=0
    #allocation6 [shape = 'u8[4096]{0}', space=vmem, size = 0x1000, scoped, tag = 'input window, operand 2, single buffered']
    #allocation7 [shape = 's32[2]{0}', space=sflag, size = 0x8, scoped, tag = 'scoped memory for tpu_custom_call.1']
    #allocation8 [shape = 's32[2]{0}', space=sflag, size = 0x8, scoped, tag = 'scoped memory for tpu_custom_call.1']
    #allocation9 [shape = 'u8[8192]{0}', space=vmem, size = 0x2000, scoped, tag = 'output window, operand 0']
    %12 = vsyncpa [#allocation7], 0
    %13 = vsyncpa [#allocation8], 0
    %s14 = scalar_lea.sflag [#allocation8], 1
    %15 = vsyncpa %s14, 0
    loop: start=0, step=1, limit=4
    $region2: #{tpu_custom_call.1} parent=1 // loop_pre_header
      _
    $region3: #{tpu_custom_call.1} parent=1 // loop_header
      %s17 = sphi 0, %s21
      %p18 = scmp.ge.s32.totalorder %s17, 4
      %s25 = sphi 0, %s25
      %s27 = sphi 0, %s25
      %s28 = sphi 0, %s27
      %s42 = sphi 0, %s28
      %s48 = sphi 0, %s50
      %s51 = sphi 0, %s48
      %s52 = sphi 0, %s51
      %s68 = sphi 0, %s52
    $region4: #{tpu_custom_call.1} parent=1 // loop_header_branch
      %20 = sbr.rel (%p18) target = $region8
    $region5: #{tpu_custom_call.1} parent=1 // loop_body
      %s22 = ssub.s32 %s17, 1
      %s23 = ssub.s32 %s17, 2
      %s24 = sadd.s32 %s17, 1
      %s26 = sadd.s32 %s25, 1
      %p29 = scmp.eq.s32.totalorder %s17, 1
      %p30 = scmp.ne.s32.totalorder %s25, %s27
      %p31 = scmp.eq.s32.totalorder %s17, 0
      %p32 = por %p30, %p31
      %p33 = scmp.ne.s32.totalorder %s25, %s27
      %p34 = scmp.eq.s32.totalorder %s22, 1
      %p35 = por %p33, %p34
      %p36 = scmp.ne.s32.totalorder %s27, %s28
      %p37 = scmp.eq.s32.totalorder %s22, 0
      %p38 = por %p36, %p37
      %p39 = scmp.ne.s32.totalorder %s27, %s28
      %p40 = scmp.eq.s32.totalorder %s23, 1
      %p41 = por %p39, %p40
      %p43 = scmp.ne.s32.totalorder %s28, %s42
      %p44 = scmp.eq.s32.totalorder %s23, 0
      %p45 = por %p43, %p44
      %s46 = ssub.s32 %s17, %s24
      %p47 = scmp.eq.s32.totalorder %s46, 0
      %s49 = sadd.s32 %s48, 1
      %s50 = scalar_select %p47, %s48, %s49
      %p53 = pneg %p47
      %p54 = scmp.eq.s32.totalorder %s17, 1
      %p55 = por %p53, %p54
      %p56 = scmp.ne.s32.totalorder %s48, %s51
      %p57 = scmp.eq.s32.totalorder %s17, 0
      %p58 = por %p56, %p57
      %p59 = scmp.ne.s32.totalorder %s48, %s51
      %p60 = scmp.eq.s32.totalorder %s22, 1
      %p61 = por %p59, %p60
      %p62 = scmp.ne.s32.totalorder %s51, %s52
      %p63 = scmp.eq.s32.totalorder %s22, 0
      %p64 = por %p62, %p63
      %p65 = scmp.ne.s32.totalorder %s51, %s52
      %p66 = scmp.eq.s32.totalorder %s23, 1
      %p67 = por %p65, %p66
      %p69 = scmp.ne.s32.totalorder %s52, %s68
      %p70 = scmp.eq.s32.totalorder %s23, 0
      %p71 = por %p69, %p70
      %p72 = scmp.le.s32.totalorder 1, %s17
      %p73 = scmp.lt.s32.totalorder %s17, 3
      %p74 = pnand %p72, %p73
      %p75 = pneg %p74
      // Predicated region
      $region9: #{tpu_custom_call.1} parent=5 // pred_check
        _
      $region10: #{tpu_custom_call.1} parent=5 // pred_check_branch
        %77 = sbr.rel (%p74) target = $region12
      $region11: #{tpu_custom_call.1} parent=5 // pred_region
        %s78 = ssub.s32 %s17, 1
        // Predicated region
        $region13: #{tpu_custom_call.1} parent=11 // pred_check
          %p79 = pneg %p38
        $region14: #{tpu_custom_call.1} parent=11 // pred_check_branch
          %81 = sbr.rel (%p79) target = $region16
        $region15: #{tpu_custom_call.1} parent=11 // pred_region
          %s83 = ssub.s32 128, 128
          %84 = vsyncadd [#allocation7], %s83
          %s86 = sshll.u32 [#allocation6], 4
          %s87 = int_to_ptr.vmem [resolvable:$true] %s86
          %89 = dma.hbm_to_vmem [thread:$0]  %s2, 128, %s87, [#allocation7]
        $region16: #{tpu_custom_call.1} parent=11 // pred_fallthru
          _
      $region12: #{tpu_custom_call.1} parent=5 // pred_fallthru
        _
      %p90 = scmp.lt.s32.totalorder %s17, 2
      // Predicated region
      $region17: #{tpu_custom_call.1} parent=5 // pred_check
        %p91 = pneg %p90
      $region18: #{tpu_custom_call.1} parent=5 // pred_check_branch
        %93 = sbr.rel (%p91) target = $region20
      $region19: #{tpu_custom_call.1} parent=5 // pred_region
        _
      $region20: #{tpu_custom_call.1} parent=5 // pred_fallthru
        _
      %p94 = scmp.le.s32.totalorder 1, %s17
      %p95 = scmp.lt.s32.totalorder %s17, 3
      %p96 = pnand %p94, %p95
      %p97 = pneg %p96
      // Predicated region
      $region21: #{tpu_custom_call.1} parent=5 // pred_check
        _
      $region22: #{tpu_custom_call.1} parent=5 // pred_check_branch
        %99 = sbr.rel (%p96) target = $region24
      $region23: #{tpu_custom_call.1} parent=5 // pred_region
        %s100 = ssub.s32 %s17, 1
        // Predicated region
        $region25: #{tpu_custom_call.1} parent=23 // pred_check
          %p101 = pneg %p38
        $region26: #{tpu_custom_call.1} parent=23 // pred_check_branch
          %103 = sbr.rel (%p101) target = $region28
        $region27: #{tpu_custom_call.1} parent=23 // pred_region
          %104 = dma.done [#allocation7], 128
        $region28: #{tpu_custom_call.1} parent=23 // pred_fallthru
          _
        %p105 = pneg %p38
        %p106 = pneg %p35
        %p107 = pneg %p64
        %p108 = pneg %p61
        %s109 = sand.u32 %s51, 1
        %s110 = scalar_lea.sflag [#allocation8], %s109
        %s111 = sand.u32 %s51, 1
        %s112 = smul.addr %s111, 8
        %s113 = scalar_lea.vmem [#allocation9], %s112
        %s114 = smul.u32 %s22, 128
        %s115 = sld [smem:[#allocation5 + %s114]]
        %s116 = smul.addr %s115, 16
        %s117 = scalar_lea.hbm %s1, %s116
        // Predicated region
        $region29: #{tpu_custom_call.1} parent=23 // pred_check
          _
        $region30: #{tpu_custom_call.1} parent=23 // pred_check_branch
          %119 = sbr.rel target = $region32
        $region31: #{tpu_custom_call.1} parent=23 // pred_region
          %120 = sst [smem:[#allocation12]] [#allocation11]
          %121 = sst [smem:[#allocation13]] [#allocation10]
        $region32: #{tpu_custom_call.1} parent=23 // pred_fallthru
          _
        %123 = shalt.err (0)
        %s125 = sshll.u32 [#allocation2], 4
        %s126 = int_to_ptr.vmem [resolvable:$true] %s125
        %128 = dma.hbm_to_vmem [thread:$0]  %s117, 16, %s126, [#allocation3]
        %s129 = sadd.s32 %s114, 1
        %s130 = sld [smem:[#allocation5 + %s129]]
        %s131 = smul.addr %s130, 16
        %s132 = scalar_lea.hbm %s1, %s131
        %s133 = scalar_lea.vmem [#allocation2], 1
        %s134 = scalar_lea.sflag [#allocation3], 1
        // Predicated region
        $region33: #{tpu_custom_call.1} parent=23 // pred_check
          _
        $region34: #{tpu_custom_call.1} parent=23 // pred_check_branch
          %136 = sbr.rel target = $region36
        $region35: #{tpu_custom_call.1} parent=23 // pred_region
          %137 = sst [smem:[#allocation12]] [#allocation15]
          %138 = sst [smem:[#allocation13]] [#allocation14]
        $region36: #{tpu_custom_call.1} parent=23 // pred_fallthru
          _
        %140 = shalt.err (0)
        %s142 = sshll.u32 %s133, 4
        %s143 = int_to_ptr.vmem [resolvable:$true] %s142
        %145 = dma.hbm_to_vmem [thread:$0]  %s132, 16, %s143, %s134
        %s146 = sadd.s32 %s114, 2
        %s147 = sld [smem:[#allocation5 + %s146]]
        %s148 = smul.addr %s147, 16
        %s149 = scalar_lea.hbm %s1, %s148
        %s150 = scalar_lea.vmem [#allocation2], 2
        %s151 = scalar_lea.sflag [#allocation3], 2
        // Predicated region
        $region37: #{tpu_custom_call.1} parent=23 // pred_check
          _
        $region38: #{tpu_custom_call.1} parent=23 // pred_check_branch
          %153 = sbr.rel target = $region40
        $region39: #{tpu_custom_call.1} parent=23 // pred_region
          %154 = sst [smem:[#allocation12]] [#allocation17]
          %155 = sst [smem:[#allocation13]] [#allocation16]
        $region40: #{tpu_custom_call.1} parent=23 // pred_fallthru
          _
        %157 = shalt.err (0)
        %s159 = sshll.u32 %s150, 4
        %s160 = int_to_ptr.vmem [resolvable:$true] %s159
        %162 = dma.hbm_to_vmem [thread:$0]  %s149, 16, %s160, %s151
        %s163 = sadd.s32 %s114, 3
        %s164 = sld [smem:[#allocation5 + %s163]]
        %s165 = smul.addr %s164, 16
        %s166 = scalar_lea.hbm %s1, %s165
        %s167 = scalar_lea.vmem [#allocation2], 3
        %s168 = scalar_lea.sflag [#allocation3], 3
        // Predicated region
        $region41: #{tpu_custom_call.1} parent=23 // pred_check
          _
        $region42: #{tpu_custom_call.1} parent=23 // pred_check_branch
          %170 = sbr.rel target = $region44
        $region43: #{tpu_custom_call.1} parent=23 // pred_region
          %171 = sst [smem:[#allocation12]] [#allocation19]
          %172 = sst [smem:[#allocation13]] [#allocation18]
        $region44: #{tpu_custom_call.1} parent=23 // pred_fallthru
          _
        %174 = shalt.err (0)
        %s176 = sshll.u32 %s167, 4
        %s177 = int_to_ptr.vmem [resolvable:$true] %s176
        %179 = dma.hbm_to_vmem [thread:$0]  %s166, 16, %s177, %s168
        %s180 = sadd.s32 %s114, 4
        %s181 = sld [smem:[#allocation5 + %s180]]
        %s182 = smul.addr %s181, 16
        %s183 = scalar_lea.hbm %s1, %s182
        %s184 = scalar_lea.vmem [#allocation2], 4
        %s185 = scalar_lea.sflag [#allocation3], 4
        // Predicated region
        $region45: #{tpu_custom_call.1} parent=23 // pred_check
          _
        $region46: #{tpu_custom_call.1} parent=23 // pred_check_branch
          %187 = sbr.rel target = $region48
        $region47: #{tpu_custom_call.1} parent=23 // pred_region
          %188 = sst [smem:[#allocation12]] [#allocation21]
          %189 = sst [smem:[#allocation13]] [#allocation20]
        $region48: #{tpu_custom_call.1} parent=23 // pred_fallthru
          _
        %191 = shalt.err (0)
        %s193 = sshll.u32 %s184, 4
        %s194 = int_to_ptr.vmem [resolvable:$true] %s193
        %196 = dma.hbm_to_vmem [thread:$0]  %s183, 16, %s194, %s185
        %s197 = sadd.s32 %s114, 5
        %s198 = sld [smem:[#allocation5 + %s197]]
        %s199 = smul.addr %s198, 16
        %s200 = scalar_lea.hbm %s1, %s199
        %s201 = scalar_lea.vmem [#allocation2], 5
        %s202 = scalar_lea.sflag [#allocation3], 5
        // Predicated region
        $region49: #{tpu_custom_call.1} parent=23 // pred_check
          _
        $region50: #{tpu_custom_call.1} parent=23 // pred_check_branch
          %204 = sbr.rel target = $region52
        $region51: #{tpu_custom_call.1} parent=23 // pred_region
          %205 = sst [smem:[#allocation12]] [#allocation23]
          %206 = sst [smem:[#allocation13]] [#allocation22]
        $region52: #{tpu_custom_call.1} parent=23 // pred_fallthru
          _
        %208 = shalt.err (0)
        %s210 = sshll.u32 %s201, 4
        %s211 = int_to_ptr.vmem [resolvable:$true] %s210
        %213 = dma.hbm_to_vmem [thread:$0]  %s200, 16, %s211, %s202
        %s214 = sadd.s32 %s114, 6
        %s215 = sld [smem:[#allocation5 + %s214]]
        %s216 = smul.addr %s215, 16
        %s217 = scalar_lea.hbm %s1, %s216
        %s218 = scalar_lea.vmem [#allocation2], 6
        %s219 = scalar_lea.sflag [#allocation3], 6
        // Predicated region
        $region53: #{tpu_custom_call.1} parent=23 // pred_check
          _
        $region54: #{tpu_custom_call.1} parent=23 // pred_check_branch
          %221 = sbr.rel target = $region56
        $region55: #{tpu_custom_call.1} parent=23 // pred_region
          %222 = sst [smem:[#allocation12]] [#allocation25]
          %223 = sst [smem:[#allocation13]] [#allocation24]
        $region56: #{tpu_custom_call.1} parent=23 // pred_fallthru
          _
        %225 = shalt.err (0)
        %s227 = sshll.u32 %s218, 4
        %s228 = int_to_ptr.vmem [resolvable:$true] %s227
        %230 = dma.hbm_to_vmem [thread:$0]  %s217, 16, %s228, %s219
        %s231 = sadd.s32 %s114, 7
        %s232 = sld [smem:[#allocation5 + %s231]]
        %s233 = smul.addr %s232, 16
        %s234 = scalar_lea.hbm %s1, %s233
        %s235 = scalar_lea.vmem [#allocation2], 7
        %s236 = scalar_lea.sflag [#allocation3], 7
        // Predicated region
        $region57: #{tpu_custom_call.1} parent=23 // pred_check
          _
        $region58: #{tpu_custom_call.1} parent=23 // pred_check_branch
          %238 = sbr.rel target = $region60
        $region59: #{tpu_custom_call.1} parent=23 // pred_region
          %239 = sst [smem:[#allocation12]] [#allocation27]
          %240 = sst [smem:[#allocation13]] [#allocation26]
        $region60: #{tpu_custom_call.1} parent=23 // pred_fallthru
          _
        %242 = shalt.err (0)
        %s244 = sshll.u32 %s235, 4
        %s245 = int_to_ptr.vmem [resolvable:$true] %s244
        %247 = dma.hbm_to_vmem [thread:$0]  %s234, 16, %s245, %s236
        %s248 = smul.u32 1, 1
        %s249 = sshll.u32 %s248, 4
        %250 = dma.done [#allocation3], %s249
        %s251 = sshll.u32 %s248, 4
        %252 = dma.done %s134, %s251
        %s253 = sshll.u32 %s248, 4
        %254 = dma.done %s151, %s253
        %s255 = sshll.u32 %s248, 4
        %256 = dma.done %s168, %s255
        %s257 = sshll.u32 %s248, 4
        %258 = dma.done %s185, %s257
        %s259 = sshll.u32 %s248, 4
        %260 = dma.done %s202, %s259
        %s261 = sshll.u32 %s248, 4
        %262 = dma.done %s219, %s261
        %s263 = sshll.u32 %s248, 4
        %264 = dma.done %s236, %s263
        %v265 = vld [vmem:[#allocation2] sm:$0xff]
        %v266 = vld [vmem:[#allocation6] sm:$0xff]
        %v267 = vadd.f32 %v265, %v266
        %268 = vst [vmem:[%s113] sm:$0xff] %v267
        %s269 = sand.u32 %s51, 1
        %s270 = scalar_lea.sflag [#allocation8], %s269
        %s271 = sand.u32 %s51, 1
        %s272 = smul.addr %s271, 8
        %s273 = scalar_lea.vmem [#allocation9], %s272
        // Predicated region
        $region61: #{tpu_custom_call.1} parent=23 // pred_check
          %p274 = pneg %p61
        $region62: #{tpu_custom_call.1} parent=23 // pred_check_branch
          %276 = sbr.rel (%p274) target = $region64
        $region63: #{tpu_custom_call.1} parent=23 // pred_region
          %s278 = ssub.s32 128, 128
          %279 = vsyncadd %s270, %s278
          %s280 = smul.addr %s22, 128
          %s281 = scalar_lea.hbm %s3, %s280
          %s283 = sshll.u32 %s273, 4
          %s284 = int_to_ptr.vmem [resolvable:$true] %s283
          %286 = dma.vmem_to_hbm [thread:$0]  %s284, 128, %s281, %s270
        $region64: #{tpu_custom_call.1} parent=23 // pred_fallthru
          _
      $region24: #{tpu_custom_call.1} parent=5 // pred_fallthru
        _
      %p287 = scmp.le.s32.totalorder 2, %s17
      // Predicated region
      $region65: #{tpu_custom_call.1} parent=5 // pred_check
        %p288 = pneg %p287
      $region66: #{tpu_custom_call.1} parent=5 // pred_check_branch
        %290 = sbr.rel (%p288) target = $region68
      $region67: #{tpu_custom_call.1} parent=5 // pred_region
        %s291 = ssub.s32 %s17, 2
        // Predicated region
        $region69: #{tpu_custom_call.1} parent=67 // pred_check
          %p292 = pneg %p67
        $region70: #{tpu_custom_call.1} parent=67 // pred_check_branch
          %294 = sbr.rel (%p292) target = $region72
        $region71: #{tpu_custom_call.1} parent=67 // pred_region
          %s295 = sand.u32 %s52, 1
          %s296 = scalar_lea.sflag [#allocation8], %s295
          %s297 = sand.u32 %s52, 1
          %s298 = smul.addr %s297, 8
          %s299 = scalar_lea.vmem [#allocation9], %s298
          %300 = dma.done %s296, 128
        $region72: #{tpu_custom_call.1} parent=67 // pred_fallthru
          _
      $region68: #{tpu_custom_call.1} parent=5 // pred_fallthru
        _
    $region6: #{tpu_custom_call.1} parent=1 // loop_footer
      %s21 = sadd.s32 1, %s17
    $region7: #{tpu_custom_call.1} parent=1 // loop_footer_branch
      %16 = sbr.rel target = $region3
    $region8: #{tpu_custom_call.1} parent=1 // loop_exit
      _
    %301 = vsyncpa [#allocation7], 1
    %s302 = scalar_lea.sflag [#allocation7], 1
    %303 = vsyncpa %s302, 1
    %304 = vsyncpa [#allocation8], 1
    %s305 = scalar_lea.sflag [#allocation8], 1
    %306 = vsyncpa %s305, 1
  %307 = vsyncmov [#allocation3]
  %s308 = vpop.sfrf %307
  %p309 = scmp.eq.s32.totalorder %s308, 0
  %p310 = pneg %p309
  %312 = shalt.err (%p310)
  %s313 = scalar_lea.sflag [#allocation3], 1
  %314 = vsyncmov %s313
  %s315 = vpop.sfrf %314
  %p316 = scmp.eq.s32.totalorder %s315, 0
  %p317 = pneg %p316
  %319 = shalt.err (%p317)
  %s320 = scalar_lea.sflag [#allocation3], 2
  %321 = vsyncmov %s320
  %s322 = vpop.sfrf %321
  %p323 = scmp.eq.s32.totalorder %s322, 0
  %p324 = pneg %p323
  %326 = shalt.err (%p324)
  %s327 = scalar_lea.sflag [#allocation3], 3
  %328 = vsyncmov %s327
  %s329 = vpop.sfrf %328
  %p330 = scmp.eq.s32.totalorder %s329, 0
  %p331 = pneg %p330
  %333 = shalt.err (%p331)
  %s334 = scalar_lea.sflag [#allocation3], 4
  %335 = vsyncmov %s334
  %s336 = vpop.sfrf %335
  %p337 = scmp.eq.s32.totalorder %s336, 0
  %p338 = pneg %p337
  %340 = shalt.err (%p338)
  %s341 = scalar_lea.sflag [#allocation3], 5
  %342 = vsyncmov %s341
  %s343 = vpop.sfrf %342
  %p344 = scmp.eq.s32.totalorder %s343, 0
  %p345 = pneg %p344
  %347 = shalt.err (%p345)
  %s348 = scalar_lea.sflag [#allocation3], 6
  %349 = vsyncmov %s348
  %s350 = vpop.sfrf %349
  %p351 = scmp.eq.s32.totalorder %s350, 0
  %p352 = pneg %p351
  %354 = shalt.err (%p352)
  %s355 = scalar_lea.sflag [#allocation3], 7
  %356 = vsyncmov %s355
  %s357 = vpop.sfrf %356
  %p358 = scmp.eq.s32.totalorder %s357, 0
  %p359 = pneg %p358
  %361 = shalt.err (%p359)

</llo_original>
